<compile_context>
chip_gen: v6e
topology: v6e:2x2x1
jax: 0.10.0
libtpu: 0.0.40
codegen_flags: <defaults>
</compile_context>

<pallas_src>
import jax
import jax.numpy as jnp
from jax.experimental import pallas as pl
from jax.experimental.pallas import tpu as pltpu


def _round_up(v, m):
    return (v + m - 1) // m * m


def _make_kernel(n_layers, activation, mxu_dtype):
    """Build the fused MaskedDeepSets kernel (layer count / activation static)."""

    def act(z):
        if activation == "relu":
            return jnp.maximum(z, 0.0)
        if activation == "tanh":
            return jnp.tanh(z)
        return z  # 'id'

    def kernel(x_ref, m_ref, *rest):
        o_ref = rest[-1]
        w_refs = rest[:-1]

        h3 = x_ref[...].astype(jnp.float32)   # [blk_b, n_pad, d_in]
        m3 = m_ref[...].astype(jnp.float32)   # [blk_b, n_pad, 1]
        blk_b, n_pad, _ = h3.shape

        for l in range(n_layers):
            wc = w_refs[3 * l][...].astype(mxu_dtype)          # [d_prev, d_l]
            bc = w_refs[3 * l + 1][...].astype(jnp.float32)    # [1, d_l]
            wa = w_refs[3 * l + 2][...].astype(mxu_dtype)      # [d_prev, d_l]

            d_prev = h3.shape[-1]
            d_l = wc.shape[-1]
            m_rows = blk_b * n_pad

            # Per-node GEMM on the MXU: [(blk_b*n_pad), d_prev] @ [d_prev, d_l].
            h2 = h3.reshape(m_rows, d_prev).astype(mxu_dtype)
            z2 = jnp.dot(h2, wc, preferred_element_type=jnp.float32)

            # Masked set-sum on VPU (mul) + XLU (sublane reduce); MXU stays on
            # the GEMMs. Fake / padded rows have mask 0 -> excluded.
            s = jnp.sum(h3 * m3, axis=1)                       # [blk_b, d_prev]

            # Per-set term + bias folded into one broadcast row per set.
            row = jnp.dot(s.astype(mxu_dtype), wa,
                          preferred_element_type=jnp.float32) + bc   # [blk_b, d_l]

            z3 = z2.reshape(blk_b, n_pad, d_l) + row[:, None, :]
            h3 = act(z3)

        o_ref[...] = h3.astype(o_ref.dtype)

    return kernel


def masked_deepsets_forward(x, mask, params, activation="relu",
                            mxu_bf16=False, blk_b=None):
    """x: [B, N, D_in], mask: [B, N, 1] -> [B, N, D_out].

    params: list of per-layer dicts with keys
      "wc": [D_l_in, D_l_out]  (fc_curr weight, pre-transposed to fan_in x fan_out)
      "bc": [1, D_l_out]       (fc_curr bias)
      "wa": [D_l_in, D_l_out]  (fc_all weight, pre-transposed; no bias)
    """
    B, N, d_in = x.shape
    L = len(params)
    d_out = params[-1]["wc"].shape[1]
    mxu_dtype = jnp.bfloat16 if mxu_bf16 else jnp.float32
    io_dtype = jnp.bfloat16 if mxu_bf16 else x.dtype
    out_dtype = x.dtype

    # Sublane packing of the streamed input dtype (8 rows f32, 16 rows bf16).
    sublane = 8 * 4 // jnp.dtype(io_dtype).itemsize
    n_pad = _round_up(N, sublane)

    # Sets per grid step: target ~512 GEMM rows/step (fills 128-tall MXU on
    # v5e, 256-tall on v6e/v7x, amortizes per-step overhead) while keeping at
    # least 2 grid steps so both v7x TensorCores get work.
    if blk_b is None:
        target_rows = 512
        blk_b = max(1, min(target_rows // n_pad, (B + 1) // 2))
    blk_b = max(1, min(int(blk_b), B))
    b_pad = _round_up(B, blk_b)

    # HBM layout: pad only N (sublane) and B (to BLK_B multiple); feature dims
    # stay compact (no 16x read / 8x write inflation). Padded rows get mask 0.
    x_pad = jnp.zeros((b_pad, n_pad, d_in), io_dtype).at[:B, :N, :].set(
        x.astype(io_dtype))
    mask_pad = jnp.zeros((b_pad, n_pad, 1), jnp.float32).at[:B, :N, :].set(
        mask.astype(jnp.float32))

    # Weights stay at their true (compact) dims and are VMEM-resident across
    # grid steps (constant index_map). MXU-fed weights stored in mxu dtype.
    w_args = []
    for p in params:
        w_args.append(p["wc"].astype(mxu_dtype))
        w_args.append(p["bc"].astype(jnp.float32))
        w_args.append(p["wa"].astype(mxu_dtype))

    # --- BlockSpecs (helper functions -> fresh closure per operand) ---
    def stream_spec(shape):
        nd = len(shape)
        return pl.BlockSpec((blk_b,) + tuple(shape[1:]),
                            lambda b: (b,) + (0,) * (nd - 1))

    def resident_spec(shape):
        nd = len(shape)
        return pl.BlockSpec(tuple(shape), lambda b: (0,) * nd)

    in_specs = [stream_spec(x_pad.shape), stream_spec(mask_pad.shape)]
    in_specs += [resident_spec(w.shape) for w in w_args]
    out_spec = pl.BlockSpec((blk_b, n_pad, d_out), lambda b: (b, 0, 0))

    # --- Cost estimate (helps XLA schedule surrounding ops) ---
    flops = 0
    d_prev = d_in
    hidden_dims_sum = 0
    for p in params:
        d_l = p["wc"].shape[1]
        flops += 2 * B * N * d_prev * d_l   # per-node GEMM
        flops += 2 * B * d_prev * d_l       # per-set GEMM
        hidden_dims_sum += d_l
        d_prev = d_l
    transcendentals = B * N * hidden_dims_sum if activation == "tanh" else 0
    io_itemsize = jnp.dtype(io_dtype).itemsize
    out_itemsize = jnp.dtype(out_dtype).itemsize
    weight_bytes = sum(int(w.size) * w.dtype.itemsize for w in w_args)
    bytes_accessed = (int(x_pad.size) * io_itemsize
                      + int(mask_pad.size) * 4
                      + weight_bytes
                      + b_pad * n_pad * d_out * out_itemsize)
    cost = pl.CostEstimate(flops=int(flops),
                           transcendentals=int(transcendentals),
                           bytes_accessed=int(bytes_accessed))

    # --- Explicit VMEM budget (v5e default scoped limit is only 16 MiB) ---
    d_max = max([d_in] + [p["wc"].shape[1] for p in params])
    stream_bytes = blk_b * n_pad * (d_in * io_itemsize + 4 + d_out * out_itemsize)
    interm_bytes = 6 * blk_b * n_pad * d_max * 4     # live f32 temporaries (rough)
    vmem_needed = 2 * stream_bytes + 2 * weight_bytes + interm_bytes
    vmem_limit_bytes = int(min(max(2 * vmem_needed, 32 << 20), 64 << 20))

    kernel = _make_kernel(L, activation, mxu_dtype)

    out_pad = pl.pallas_call(
        kernel,
        out_shape=jax.ShapeDtypeStruct((b_pad, n_pad, d_out), out_dtype),
        grid_spec=pltpu.PrefetchScalarGridSpec(
            num_scalar_prefetch=0,
            grid=(b_pad // blk_b,),
            in_specs=in_specs,
            out_specs=out_spec,
        ),
        compiler_params=pltpu.CompilerParams(
            dimension_semantics=("parallel",),
            vmem_limit_bytes=vmem_limit_bytes),
        cost_estimate=cost,
    )(x_pad, mask_pad, *w_args)

    return out_pad[:B, :N, :]


def init_params(key, n_layers, in_dims, hidden_dims, out_dims):
    """PyTorch-style nn.Linear init; weights stored transposed [fan_in, fan_out]."""
    dims = [in_dims] + [hidden_dims] * (n_layers - 1) + [out_dims]
    ks = jax.random.split(key, 3 * n_layers)
    params = []
    for l in range(n_layers):
        fi, fo = dims[l], dims[l + 1]
        bound = 1.0 / float(fi) ** 0.5
        wc = jax.random.uniform(ks[3 * l], (fi, fo), jnp.float32, -bound, bound)
        bc = jax.random.uniform(ks[3 * l + 1], (1, fo), jnp.float32, -bound, bound)
        wa = jax.random.uniform(ks[3 * l + 2], (fi, fo), jnp.float32, -bound, bound)
        params.append(dict(wc=wc, bc=bc, wa=wa))
    return params


def _reference_forward(x, mask, params, activation="relu"):
    """Pure-JAX reference mirroring the PyTorch MaskedDeepSets forward."""
    def act(z):
        if activation == "relu":
            return jnp.maximum(z, 0.0)
        if activation == "tanh":
            return jnp.tanh(z)
        return z

    h = x.astype(jnp.float32)
    m = mask.astype(jnp.float32)
    for p in params:
        z_curr = h @ p["wc"] + p["bc"]
        z_all = (h * m).sum(axis=1, keepdims=True) @ p["wa"]
        h = act(z_curr + z_all)
    return h.astype(x.dtype)


if __name__ == "__main__":
    # n_layers=3 -> two (in->hidden / hidden->hidden) layers + final hidden->out.
    n_layers, in_dims, hidden_dims, out_dims = 3, 8, 32, 16
    B, N = 2, 8

    key = jax.random.PRNGKey(0)
    k_x, k_m, k_p, k_x2, k_m2 = jax.random.split(key, 5)

    x = jax.random.normal(k_x, (B, N, in_dims), dtype=jnp.float32)
    mask = (jax.random.uniform(k_m, (B, N, 1)) > 0.3).astype(jnp.float32)
    params = init_params(k_p, n_layers, in_dims, hidden_dims, out_dims)

    # f32 path (exact semantics), relu.
    ref = _reference_forward(x, mask, params, "relu")
    out = jax.block_until_ready(masked_deepsets_forward(x, mask, params, "relu"))
    assert out.shape == (B, N, out_dims), out.shape
    assert jnp.allclose(out, ref, atol=1e-3, rtol=1e-3), "f32 relu kernel mismatch"

    # tanh activation path (EUP).
    ref_t = _reference_forward(x, mask, params, "tanh")
    out_t = jax.block_until_ready(masked_deepsets_forward(x, mask, params, "tanh"))
    assert jnp.allclose(out_t, ref_t, atol=1e-3, rtol=1e-3), "f32 tanh kernel mismatch"

    # Batched-blocks path (blk_b > 1 -> multi-set GEMM M dimension).
    B2 = 8
    x2 = jax.random.normal(k_x2, (B2, N, in_dims), dtype=jnp.float32)
    mask2 = (jax.random.uniform(k_m2, (B2, N, 1)) > 0.3).astype(jnp.float32)
    ref2 = _reference_forward(x2, mask2, params, "relu")
    out2 = jax.block_until_ready(masked_deepsets_forward(x2, mask2, params, "relu"))
    assert out2.shape == (B2, N, out_dims), out2.shape
    assert jnp.allclose(out2, ref2, atol=1e-3, rtol=1e-3), "batched kernel mismatch"

    # bf16-streamed / bf16-fed MXU path; accumulation stays f32.
    out_bf16 = jax.block_until_ready(
        masked_deepsets_forward(x, mask, params, "relu", mxu_bf16=True))
    assert jnp.allclose(out_bf16, ref, atol=1e-1, rtol=1e-1), "bf16 kernel mismatch"

    print("KERNEL_OK")
</pallas_src>

<mosaic_0001>
module attributes {stable_mosaic.version = 11 : i64} {
  func.func @kernel(%arg0: i32, %arg1: memref<1x8x8xf32, #tpu.memory_space<vmem>>, %arg2: memref<1x8x1xf32, #tpu.memory_space<vmem>>, %arg3: memref<8x32xf32, #tpu.memory_space<vmem>>, %arg4: memref<1x32xf32, #tpu.memory_space<vmem>>, %arg5: memref<8x32xf32, #tpu.memory_space<vmem>>, %arg6: memref<32x32xf32, #tpu.memory_space<vmem>>, %arg7: memref<1x32xf32, #tpu.memory_space<vmem>>, %arg8: memref<32x32xf32, #tpu.memory_space<vmem>>, %arg9: memref<32x16xf32, #tpu.memory_space<vmem>>, %arg10: memref<1x16xf32, #tpu.memory_space<vmem>>, %arg11: memref<32x16xf32, #tpu.memory_space<vmem>>, %arg12: memref<1x8x16xf32, #tpu.memory_space<vmem>>) attributes {dimension_semantics = [#tpu.dimension_semantics<parallel>], iteration_bounds = array<i64: 2>, scalar_prefetch = 0 : i64, scratch_operands = 0 : i64, tpu.core_type = #tpu.core_type<tc>, window_params = [{transform_indices = @transform_0, window_bounds = array<i64: 1, 8, 8>}, {transform_indices = @transform_1, window_bounds = array<i64: 1, 8, 1>}, {pipeline_mode = #tpu.pipeline_mode<synchronous>, transform_indices = @transform_2, window_bounds = array<i64: 8, 32>}, {pipeline_mode = #tpu.pipeline_mode<synchronous>, transform_indices = @transform_3, window_bounds = array<i64: 1, 32>}, {pipeline_mode = #tpu.pipeline_mode<synchronous>, transform_indices = @transform_4, window_bounds = array<i64: 8, 32>}, {pipeline_mode = #tpu.pipeline_mode<synchronous>, transform_indices = @transform_5, window_bounds = array<i64: 32, 32>}, {pipeline_mode = #tpu.pipeline_mode<synchronous>, transform_indices = @transform_6, window_bounds = array<i64: 1, 32>}, {pipeline_mode = #tpu.pipeline_mode<synchronous>, transform_indices = @transform_7, window_bounds = array<i64: 32, 32>}, {pipeline_mode = #tpu.pipeline_mode<synchronous>, transform_indices = @transform_8, window_bounds = array<i64: 32, 16>}, {pipeline_mode = #tpu.pipeline_mode<synchronous>, transform_indices = @transform_9, window_bounds = array<i64: 1, 16>}, {pipeline_mode = #tpu.pipeline_mode<synchronous>, transform_indices = @transform_10, window_bounds = array<i64: 32, 16>}, {transform_indices = @transform_11, window_bounds = array<i64: 1, 8, 16>}]} {
    %c0 = arith.constant 0 : index
    %c0_0 = arith.constant 0 : index
    %c0_1 = arith.constant 0 : index
    %0 = vector.load %arg1[%c0, %c0_0, %c0_1] : memref<1x8x8xf32, #tpu.memory_space<vmem>>, vector<1x8x8xf32>
    %c0_2 = arith.constant 0 : index
    %c0_3 = arith.constant 0 : index
    %c0_4 = arith.constant 0 : index
    %1 = vector.load %arg2[%c0_2, %c0_3, %c0_4] : memref<1x8x1xf32, #tpu.memory_space<vmem>>, vector<1x8x1xf32>
    %c0_5 = arith.constant 0 : index
    %c0_6 = arith.constant 0 : index
    %2 = vector.load %arg3[%c0_5, %c0_6] : memref<8x32xf32, #tpu.memory_space<vmem>>, vector<8x32xf32>
    %c0_7 = arith.constant 0 : index
    %c0_8 = arith.constant 0 : index
    %3 = vector.load %arg4[%c0_7, %c0_8] : memref<1x32xf32, #tpu.memory_space<vmem>>, vector<1x32xf32>
    %c0_9 = arith.constant 0 : index
    %c0_10 = arith.constant 0 : index
    %4 = vector.load %arg5[%c0_9, %c0_10] : memref<8x32xf32, #tpu.memory_space<vmem>>, vector<8x32xf32>
    %5 = vector.shape_cast %0 : vector<1x8x8xf32> to vector<8x8xf32>
    %cst = arith.constant dense<0.000000e+00> : vector<8x32xf32>
    %6 = tpu.matmul %5, %2, %cst {dimension_numbers = #tpu.dot_dimension_numbers<[1], [0], [0], [1], [0, 0, 1, 1], [], []>} : vector<8x8xf32>, vector<8x32xf32>, vector<8x32xf32> -> vector<8x32xf32>
    %7 = vector.broadcast %1 : vector<1x8x1xf32> to vector<1x8x8xf32>
    %8 = arith.mulf %0, %7 : vector<1x8x8xf32>
    %cst_11 = arith.constant dense<0.000000e+00> : vector<1x8xf32>
    %9 = vector.multi_reduction <add>, %8, %cst_11 [1] : vector<1x8x8xf32> to vector<1x8xf32>
    %cst_12 = arith.constant dense<0.000000e+00> : vector<1x32xf32>
    %10 = tpu.matmul %9, %4, %cst_12 {dimension_numbers = #tpu.dot_dimension_numbers<[1], [0], [0], [1], [0, 0, 1, 1], [], []>} : vector<1x8xf32>, vector<8x32xf32>, vector<1x32xf32> -> vector<1x32xf32>
    %11 = arith.addf %10, %3 : vector<1x32xf32>
    %12 = vector.shape_cast %6 : vector<8x32xf32> to vector<1x8x32xf32>
    %13 = vector.shape_cast %11 : vector<1x32xf32> to vector<1x1x32xf32>
    %14 = vector.broadcast %13 : vector<1x1x32xf32> to vector<1x8x32xf32>
    %15 = arith.addf %12, %14 : vector<1x8x32xf32>
    %cst_13 = arith.constant 0.000000e+00 : f32
    %16 = vector.broadcast %cst_13 : f32 to vector<1x8x32xf32>
    %17 = arith.maximumf %15, %16 : vector<1x8x32xf32>
    %c0_14 = arith.constant 0 : index
    %c0_15 = arith.constant 0 : index
    %18 = vector.load %arg6[%c0_14, %c0_15] : memref<32x32xf32, #tpu.memory_space<vmem>>, vector<32x32xf32>
    %c0_16 = arith.constant 0 : index
    %c0_17 = arith.constant 0 : index
    %19 = vector.load %arg7[%c0_16, %c0_17] : memref<1x32xf32, #tpu.memory_space<vmem>>, vector<1x32xf32>
    %c0_18 = arith.constant 0 : index
    %c0_19 = arith.constant 0 : index
    %20 = vector.load %arg8[%c0_18, %c0_19] : memref<32x32xf32, #tpu.memory_space<vmem>>, vector<32x32xf32>
    %21 = vector.shape_cast %17 : vector<1x8x32xf32> to vector<8x32xf32>
    %cst_20 = arith.constant dense<0.000000e+00> : vector<8x32xf32>
    %22 = tpu.matmul %21, %18, %cst_20 {dimension_numbers = #tpu.dot_dimension_numbers<[1], [0], [0], [1], [0, 0, 1, 1], [], []>} : vector<8x32xf32>, vector<32x32xf32>, vector<8x32xf32> -> vector<8x32xf32>
    %23 = vector.broadcast %1 : vector<1x8x1xf32> to vector<1x8x32xf32>
    %24 = arith.mulf %17, %23 : vector<1x8x32xf32>
    %cst_21 = arith.constant dense<0.000000e+00> : vector<1x32xf32>
    %25 = vector.multi_reduction <add>, %24, %cst_21 [1] : vector<1x8x32xf32> to vector<1x32xf32>
    %cst_22 = arith.constant dense<0.000000e+00> : vector<1x32xf32>
    %26 = tpu.matmul %25, %20, %cst_22 {dimension_numbers = #tpu.dot_dimension_numbers<[1], [0], [0], [1], [0, 0, 1, 1], [], []>} : vector<1x32xf32>, vector<32x32xf32>, vector<1x32xf32> -> vector<1x32xf32>
    %27 = arith.addf %26, %19 : vector<1x32xf32>
    %28 = vector.shape_cast %22 : vector<8x32xf32> to vector<1x8x32xf32>
    %29 = vector.shape_cast %27 : vector<1x32xf32> to vector<1x1x32xf32>
    %30 = vector.broadcast %29 : vector<1x1x32xf32> to vector<1x8x32xf32>
    %31 = arith.addf %28, %30 : vector<1x8x32xf32>
    %cst_23 = arith.constant 0.000000e+00 : f32
    %32 = vector.broadcast %cst_23 : f32 to vector<1x8x32xf32>
    %33 = arith.maximumf %31, %32 : vector<1x8x32xf32>
    %c0_24 = arith.constant 0 : index
    %c0_25 = arith.constant 0 : index
    %34 = vector.load %arg9[%c0_24, %c0_25] : memref<32x16xf32, #tpu.memory_space<vmem>>, vector<32x16xf32>
    %c0_26 = arith.constant 0 : index
    %c0_27 = arith.constant 0 : index
    %35 = vector.load %arg10[%c0_26, %c0_27] : memref<1x16xf32, #tpu.memory_space<vmem>>, vector<1x16xf32>
    %c0_28 = arith.constant 0 : index
    %c0_29 = arith.constant 0 : index
    %36 = vector.load %arg11[%c0_28, %c0_29] : memref<32x16xf32, #tpu.memory_space<vmem>>, vector<32x16xf32>
    %37 = vector.shape_cast %33 : vector<1x8x32xf32> to vector<8x32xf32>
    %cst_30 = arith.constant dense<0.000000e+00> : vector<8x16xf32>
    %38 = tpu.matmul %37, %34, %cst_30 {dimension_numbers = #tpu.dot_dimension_numbers<[1], [0], [0], [1], [0, 0, 1, 1], [], []>} : vector<8x32xf32>, vector<32x16xf32>, vector<8x16xf32> -> vector<8x16xf32>
    %39 = vector.broadcast %1 : vector<1x8x1xf32> to vector<1x8x32xf32>
    %40 = arith.mulf %33, %39 : vector<1x8x32xf32>
    %cst_31 = arith.constant dense<0.000000e+00> : vector<1x32xf32>
    %41 = vector.multi_reduction <add>, %40, %cst_31 [1] : vector<1x8x32xf32> to vector<1x32xf32>
    %cst_32 = arith.constant dense<0.000000e+00> : vector<1x16xf32>
    %42 = tpu.matmul %41, %36, %cst_32 {dimension_numbers = #tpu.dot_dimension_numbers<[1], [0], [0], [1], [0, 0, 1, 1], [], []>} : vector<1x32xf32>, vector<32x16xf32>, vector<1x16xf32> -> vector<1x16xf32>
    %43 = arith.addf %42, %35 : vector<1x16xf32>
    %44 = vector.shape_cast %38 : vector<8x16xf32> to vector<1x8x16xf32>
    %45 = vector.shape_cast %43 : vector<1x16xf32> to vector<1x1x16xf32>
    %46 = vector.broadcast %45 : vector<1x1x16xf32> to vector<1x8x16xf32>
    %47 = arith.addf %44, %46 : vector<1x8x16xf32>
    %cst_33 = arith.constant 0.000000e+00 : f32
    %48 = vector.broadcast %cst_33 : f32 to vector<1x8x16xf32>
    %49 = arith.maximumf %47, %48 : vector<1x8x16xf32>
    %c0_34 = arith.constant 0 : index
    %c0_35 = arith.constant 0 : index
    %c0_36 = arith.constant 0 : index
    %50 = vector.load %arg12[%c0_34, %c0_35, %c0_36] : memref<1x8x16xf32, #tpu.memory_space<vmem>>, vector<1x8x16xf32>
    tpu.vector_store %arg12[%c0_34, %c0_35, %c0_36], %49 {strides = array<i32>} : memref<1x8x16xf32, #tpu.memory_space<vmem>>, vector<1x8x16xf32>,
    return
  }
  func.func @transform_0(%arg0: i32) -> (i32, i32, i32) {
    %c0_i32 = arith.constant 0 : i32
    %c0_i32_0 = arith.constant 0 : i32
    %c0_i32_1 = arith.constant 0 : i32
    return %arg0, %c0_i32, %c0_i32_0 : i32, i32, i32
  }
  func.func @transform_1(%arg0: i32) -> (i32, i32, i32) {
    %c0_i32 = arith.constant 0 : i32
    %c0_i32_0 = arith.constant 0 : i32
    %c0_i32_1 = arith.constant 0 : i32
    return %arg0, %c0_i32, %c0_i32_0 : i32, i32, i32
  }
  func.func @transform_2(%arg0: i32) -> (i32, i32) {
    %c0_i32 = arith.constant 0 : i32
    %c0_i32_0 = arith.constant 0 : i32
    %c0_i32_1 = arith.constant 0 : i32
    return %c0_i32, %c0_i32_0 : i32, i32
  }
  func.func @transform_3(%arg0: i32) -> (i32, i32) {
    %c0_i32 = arith.constant 0 : i32
    %c0_i32_0 = arith.constant 0 : i32
    %c0_i32_1 = arith.constant 0 : i32
    return %c0_i32, %c0_i32_0 : i32, i32
  }
  func.func @transform_4(%arg0: i32) -> (i32, i32) {
    %c0_i32 = arith.constant 0 : i32
    %c0_i32_0 = arith.constant 0 : i32
    %c0_i32_1 = arith.constant 0 : i32
    return %c0_i32, %c0_i32_0 : i32, i32
  }
  func.func @transform_5(%arg0: i32) -> (i32, i32) {
    %c0_i32 = arith.constant 0 : i32
    %c0_i32_0 = arith.constant 0 : i32
    %c0_i32_1 = arith.constant 0 : i32
    return %c0_i32, %c0_i32_0 : i32, i32
  }
  func.func @transform_6(%arg0: i32) -> (i32, i32) {
    %c0_i32 = arith.constant 0 : i32
    %c0_i32_0 = arith.constant 0 : i32
    %c0_i32_1 = arith.constant 0 : i32
    return %c0_i32, %c0_i32_0 : i32, i32
  }
  func.func @transform_7(%arg0: i32) -> (i32, i32) {
    %c0_i32 = arith.constant 0 : i32
    %c0_i32_0 = arith.constant 0 : i32
    %c0_i32_1 = arith.constant 0 : i32
    return %c0_i32, %c0_i32_0 : i32, i32
  }
  func.func @transform_8(%arg0: i32) -> (i32, i32) {
    %c0_i32 = arith.constant 0 : i32
    %c0_i32_0 = arith.constant 0 : i32
    %c0_i32_1 = arith.constant 0 : i32
    return %c0_i32, %c0_i32_0 : i32, i32
  }
  func.func @transform_9(%arg0: i32) -> (i32, i32) {
    %c0_i32 = arith.constant 0 : i32
    %c0_i32_0 = arith.constant 0 : i32
    %c0_i32_1 = arith.constant 0 : i32
    return %c0_i32, %c0_i32_0 : i32, i32
  }
  func.func @transform_10(%arg0: i32) -> (i32, i32) {
    %c0_i32 = arith.constant 0 : i32
    %c0_i32_0 = arith.constant 0 : i32
    %c0_i32_1 = arith.constant 0 : i32
    return %c0_i32, %c0_i32_0 : i32, i32
  }
  func.func @transform_11(%arg0: i32) -> (i32, i32, i32) {
    %c0_i32 = arith.constant 0 : i32
    %c0_i32_0 = arith.constant 0 : i32
    %c0_i32_1 = arith.constant 0 : i32
    return %arg0, %c0_i32, %c0_i32_0 : i32, i32, i32
  }
}

</mosaic_0001>

<llo_original>
// kernel: tpu_custom_call.1
$region0: #{tpu_custom_call.1}
  #allocation0 [shape = 'u32[]', space=smem, size = 0x4, offset = 0x4, fixed_abs, tag = 'smem constant byte address 0x4 - core index']
  #allocation1 [shape = 'u32[144,128]{1,0:T(1,128)}', space=vmem, size = 0x12000, scoped, tag = 'internal scratch']
  %s0 = inlined_call_operand.vmem [shape: f32[2,8,8], index: 0, kind: input, shape index: {}]
  %s1 = inlined_call_operand.vmem [shape: f32[2,8,1], index: 1, kind: input, shape index: {}]
  %s2 = inlined_call_operand.vmem [shape: f32[8,32], index: 2, kind: input, shape index: {}]
  %s3 = inlined_call_operand.hbm [shape: f32[1,32], index: 3, kind: input, shape index: {}]
  %s4 = inlined_call_operand.vmem [shape: f32[8,32], index: 4, kind: input, shape index: {}]
  %s5 = inlined_call_operand.vmem [shape: f32[32,32], index: 5, kind: input, shape index: {}]
  %s6 = inlined_call_operand.hbm [shape: f32[1,32], index: 6, kind: input, shape index: {}]
  %s7 = inlined_call_operand.vmem [shape: f32[32,32], index: 7, kind: input, shape index: {}]
  %s8 = inlined_call_operand.vmem [shape: f32[32,16], index: 8, kind: input, shape index: {}]
  %s9 = inlined_call_operand.vmem [shape: f32[1,16], index: 9, kind: input, shape index: {}]
  %s10 = inlined_call_operand.vmem [shape: f32[32,16], index: 10, kind: input, shape index: {}]
  %s11 = inlined_call_operand.hbm [shape: f32[2,8,16], index: 11, kind: output, shape index: {}]
  %s12 = sld [smem:[#allocation0]]
  $region85: #{tpu_custom_call.1} parent=0
    _
  %s14 = ssub.s32 1, %s12
  %s15 = scalar_select 0, %s14, %s12
  $region1: #{tpu_custom_call.1} parent=0
    #allocation2 [shape = 'u8[512]{0}', space=vmem, size = 0x400, scoped, tag = 'input window, operand 3, single buffered']
    #allocation3 [shape = 's32[2]{0}', space=sflag, size = 0x8, scoped, tag = 'scoped memory for tpu_custom_call.1']
    #allocation4 [shape = 's32[2]{0}', space=sflag, size = 0x8, scoped, tag = 'scoped memory for tpu_custom_call.1']
    #allocation5 [shape = 'u8[512]{0}', space=vmem, size = 0x400, scoped, tag = 'input window, operand 6, single buffered']
    #allocation6 [shape = 's32[1]{0}', space=sflag, size = 0x4, scoped, tag = 'scoped memory for tpu_custom_call.1']
    #allocation7 [shape = 'u8[8192]{0}', space=vmem, size = 0x2000, scoped, tag = 'output window, operand 0']
    %16 = vsyncpa [#allocation3], 0
    %17 = vsyncpa [#allocation6], 0
    %18 = vsyncpa [#allocation4], 0
    %s19 = scalar_lea.sflag [#allocation4], 1
    %20 = vsyncpa %s19, 0
    loop: start=0, step=1, limit=4
    $region2: #{tpu_custom_call.1} parent=1 // loop_pre_header
      _
    $region3: #{tpu_custom_call.1} parent=1 // loop_header
      %s22 = sphi 0, %s26
      %p23 = scmp.ge.s32.totalorder %s22, 4
      %s32 = sphi 0, %s34
      %s35 = sphi 0, %s32
      %s36 = sphi 0, %s35
      %s52 = sphi 0, %s36
      %s58 = sphi 0, %s60
      %s61 = sphi 0, %s58
      %s62 = sphi 0, %s61
      %s78 = sphi 0, %s62
      %s82 = sphi 0, %s82
      %s84 = sphi 0, %s82
      %s85 = sphi 0, %s84
      %s99 = sphi 0, %s85
      %s103 = sphi 0, %s103
      %s105 = sphi 0, %s103
      %s106 = sphi 0, %s105
      %s120 = sphi 0, %s106
      %s124 = sphi 0, %s124
      %s126 = sphi 0, %s124
      %s127 = sphi 0, %s126
      %s141 = sphi 0, %s127
      %s145 = sphi 0, %s145
      %s147 = sphi 0, %s145
      %s148 = sphi 0, %s147
      %s162 = sphi 0, %s148
      %s166 = sphi 0, %s166
      %s168 = sphi 0, %s166
      %s169 = sphi 0, %s168
      %s183 = sphi 0, %s169
      %s187 = sphi 0, %s187
      %s189 = sphi 0, %s187
      %s190 = sphi 0, %s189
      %s204 = sphi 0, %s190
      %s208 = sphi 0, %s208
      %s210 = sphi 0, %s208
      %s211 = sphi 0, %s210
      %s225 = sphi 0, %s211
      %s229 = sphi 0, %s229
      %s231 = sphi 0, %s229
      %s232 = sphi 0, %s231
      %s246 = sphi 0, %s232
      %s250 = sphi 0, %s250
      %s252 = sphi 0, %s250
      %s253 = sphi 0, %s252
      %s267 = sphi 0, %s253
      %s273 = sphi 0, %s275
      %s276 = sphi 0, %s273
      %s277 = sphi 0, %s276
      %s293 = sphi 0, %s277
    $region4: #{tpu_custom_call.1} parent=1 // loop_header_branch
      %25 = sbr.rel (%p23) target = $region8
    $region5: #{tpu_custom_call.1} parent=1 // loop_body
      %s27 = ssub.s32 %s22, 1
      %s28 = ssub.s32 %s22, 2
      %s29 = sadd.s32 %s22, 1
      %s30 = ssub.s32 %s22, %s29
      %p31 = scmp.eq.s32.totalorder %s30, 0
      %s33 = sadd.s32 %s32, 1
      %s34 = scalar_select %p31, %s32, %s33
      %p37 = pneg %p31
      %p38 = scmp.eq.s32.totalorder %s22, 1
      %p39 = por %p37, %p38
      %p40 = scmp.ne.s32.totalorder %s32, %s35
      %p41 = scmp.eq.s32.totalorder %s22, 0
      %p42 = por %p40, %p41
      %p43 = scmp.ne.s32.totalorder %s32, %s35
      %p44 = scmp.eq.s32.totalorder %s27, 1
      %p45 = por %p43, %p44
      %p46 = scmp.ne.s32.totalorder %s35, %s36
      %p47 = scmp.eq.s32.totalorder %s27, 0
      %p48 = por %p46, %p47
      %p49 = scmp.ne.s32.totalorder %s35, %s36
      %p50 = scmp.eq.s32.totalorder %s28, 1
      %p51 = por %p49, %p50
      %p53 = scmp.ne.s32.totalorder %s36, %s52
      %p54 = scmp.eq.s32.totalorder %s28, 0
      %p55 = por %p53, %p54
      %s56 = ssub.s32 %s22, %s29
      %p57 = scmp.eq.s32.totalorder %s56, 0
      %s59 = sadd.s32 %s58, 1
      %s60 = scalar_select %p57, %s58, %s59
      %p63 = pneg %p57
      %p64 = scmp.eq.s32.totalorder %s22, 1
      %p65 = por %p63, %p64
      %p66 = scmp.ne.s32.totalorder %s58, %s61
      %p67 = scmp.eq.s32.totalorder %s22, 0
      %p68 = por %p66, %p67
      %p69 = scmp.ne.s32.totalorder %s58, %s61
      %p70 = scmp.eq.s32.totalorder %s27, 1
      %p71 = por %p69, %p70
      %p72 = scmp.ne.s32.totalorder %s61, %s62
      %p73 = scmp.eq.s32.totalorder %s27, 0
      %p74 = por %p72, %p73
      %p75 = scmp.ne.s32.totalorder %s61, %s62
      %p76 = scmp.eq.s32.totalorder %s28, 1
      %p77 = por %p75, %p76
      %p79 = scmp.ne.s32.totalorder %s62, %s78
      %p80 = scmp.eq.s32.totalorder %s28, 0
      %p81 = por %p79, %p80
      %s83 = sadd.s32 %s82, 1
      %p86 = scmp.eq.s32.totalorder %s22, 1
      %p87 = scmp.ne.s32.totalorder %s82, %s84
      %p88 = scmp.eq.s32.totalorder %s22, 0
      %p89 = por %p87, %p88
      %p90 = scmp.ne.s32.totalorder %s82, %s84
      %p91 = scmp.eq.s32.totalorder %s27, 1
      %p92 = por %p90, %p91
      %p93 = scmp.ne.s32.totalorder %s84, %s85
      %p94 = scmp.eq.s32.totalorder %s27, 0
      %p95 = por %p93, %p94
      %p96 = scmp.ne.s32.totalorder %s84, %s85
      %p97 = scmp.eq.s32.totalorder %s28, 1
      %p98 = por %p96, %p97
      %p100 = scmp.ne.s32.totalorder %s85, %s99
      %p101 = scmp.eq.s32.totalorder %s28, 0
      %p102 = por %p100, %p101
      %s104 = sadd.s32 %s103, 1
      %p107 = scmp.eq.s32.totalorder %s22, 1
      %p108 = scmp.ne.s32.totalorder %s103, %s105
      %p109 = scmp.eq.s32.totalorder %s22, 0
      %p110 = por %p108, %p109
      %p111 = scmp.ne.s32.totalorder %s103, %s105
      %p112 = scmp.eq.s32.totalorder %s27, 1
      %p113 = por %p111, %p112
      %p114 = scmp.ne.s32.totalorder %s105, %s106
      %p115 = scmp.eq.s32.totalorder %s27, 0
      %p116 = por %p114, %p115
      %p117 = scmp.ne.s32.totalorder %s105, %s106
      %p118 = scmp.eq.s32.totalorder %s28, 1
      %p119 = por %p117, %p118
      %p121 = scmp.ne.s32.totalorder %s106, %s120
      %p122 = scmp.eq.s32.totalorder %s28, 0
      %p123 = por %p121, %p122
      %s125 = sadd.s32 %s124, 1
      %p128 = scmp.eq.s32.totalorder %s22, 1
      %p129 = scmp.ne.s32.totalorder %s124, %s126
      %p130 = scmp.eq.s32.totalorder %s22, 0
      %p131 = por %p129, %p130
      %p132 = scmp.ne.s32.totalorder %s124, %s126
      %p133 = scmp.eq.s32.totalorder %s27, 1
      %p134 = por %p132, %p133
      %p135 = scmp.ne.s32.totalorder %s126, %s127
      %p136 = scmp.eq.s32.totalorder %s27, 0
      %p137 = por %p135, %p136
      %p138 = scmp.ne.s32.totalorder %s126, %s127
      %p139 = scmp.eq.s32.totalorder %s28, 1
      %p140 = por %p138, %p139
      %p142 = scmp.ne.s32.totalorder %s127, %s141
      %p143 = scmp.eq.s32.totalorder %s28, 0
      %p144 = por %p142, %p143
      %s146 = sadd.s32 %s145, 1
      %p149 = scmp.eq.s32.totalorder %s22, 1
      %p150 = scmp.ne.s32.totalorder %s145, %s147
      %p151 = scmp.eq.s32.totalorder %s22, 0
      %p152 = por %p150, %p151
      %p153 = scmp.ne.s32.totalorder %s145, %s147
      %p154 = scmp.eq.s32.totalorder %s27, 1
      %p155 = por %p153, %p154
      %p156 = scmp.ne.s32.totalorder %s147, %s148
      %p157 = scmp.eq.s32.totalorder %s27, 0
      %p158 = por %p156, %p157
      %p159 = scmp.ne.s32.totalorder %s147, %s148
      %p160 = scmp.eq.s32.totalorder %s28, 1
      %p161 = por %p159, %p160
      %p163 = scmp.ne.s32.totalorder %s148, %s162
      %p164 = scmp.eq.s32.totalorder %s28, 0
      %p165 = por %p163, %p164
      %s167 = sadd.s32 %s166, 1
      %p170 = scmp.eq.s32.totalorder %s22, 1
      %p171 = scmp.ne.s32.totalorder %s166, %s168
      %p172 = scmp.eq.s32.totalorder %s22, 0
      %p173 = por %p171, %p172
      %p174 = scmp.ne.s32.totalorder %s166, %s168
      %p175 = scmp.eq.s32.totalorder %s27, 1
      %p176 = por %p174, %p175
      %p177 = scmp.ne.s32.totalorder %s168, %s169
      %p178 = scmp.eq.s32.totalorder %s27, 0
      %p179 = por %p177, %p178
      %p180 = scmp.ne.s32.totalorder %s168, %s169
      %p181 = scmp.eq.s32.totalorder %s28, 1
      %p182 = por %p180, %p181
      %p184 = scmp.ne.s32.totalorder %s169, %s183
      %p185 = scmp.eq.s32.totalorder %s28, 0
      %p186 = por %p184, %p185
      %s188 = sadd.s32 %s187, 1
      %p191 = scmp.eq.s32.totalorder %s22, 1
      %p192 = scmp.ne.s32.totalorder %s187, %s189
      %p193 = scmp.eq.s32.totalorder %s22, 0
      %p194 = por %p192, %p193
      %p195 = scmp.ne.s32.totalorder %s187, %s189
      %p196 = scmp.eq.s32.totalorder %s27, 1
      %p197 = por %p195, %p196
      %p198 = scmp.ne.s32.totalorder %s189, %s190
      %p199 = scmp.eq.s32.totalorder %s27, 0
      %p200 = por %p198, %p199
      %p201 = scmp.ne.s32.totalorder %s189, %s190
      %p202 = scmp.eq.s32.totalorder %s28, 1
      %p203 = por %p201, %p202
      %p205 = scmp.ne.s32.totalorder %s190, %s204
      %p206 = scmp.eq.s32.totalorder %s28, 0
      %p207 = por %p205, %p206
      %s209 = sadd.s32 %s208, 1
      %p212 = scmp.eq.s32.totalorder %s22, 1
      %p213 = scmp.ne.s32.totalorder %s208, %s210
      %p214 = scmp.eq.s32.totalorder %s22, 0
      %p215 = por %p213, %p214
      %p216 = scmp.ne.s32.totalorder %s208, %s210
      %p217 = scmp.eq.s32.totalorder %s27, 1
      %p218 = por %p216, %p217
      %p219 = scmp.ne.s32.totalorder %s210, %s211
      %p220 = scmp.eq.s32.totalorder %s27, 0
      %p221 = por %p219, %p220
      %p222 = scmp.ne.s32.totalorder %s210, %s211
      %p223 = scmp.eq.s32.totalorder %s28, 1
      %p224 = por %p222, %p223
      %p226 = scmp.ne.s32.totalorder %s211, %s225
      %p227 = scmp.eq.s32.totalorder %s28, 0
      %p228 = por %p226, %p227
      %s230 = sadd.s32 %s229, 1
      %p233 = scmp.eq.s32.totalorder %s22, 1
      %p234 = scmp.ne.s32.totalorder %s229, %s231
      %p235 = scmp.eq.s32.totalorder %s22, 0
      %p236 = por %p234, %p235
      %p237 = scmp.ne.s32.totalorder %s229, %s231
      %p238 = scmp.eq.s32.totalorder %s27, 1
      %p239 = por %p237, %p238
      %p240 = scmp.ne.s32.totalorder %s231, %s232
      %p241 = scmp.eq.s32.totalorder %s27, 0
      %p242 = por %p240, %p241
      %p243 = scmp.ne.s32.totalorder %s231, %s232
      %p244 = scmp.eq.s32.totalorder %s28, 1
      %p245 = por %p243, %p244
      %p247 = scmp.ne.s32.totalorder %s232, %s246
      %p248 = scmp.eq.s32.totalorder %s28, 0
      %p249 = por %p247, %p248
      %s251 = sadd.s32 %s250, 1
      %p254 = scmp.eq.s32.totalorder %s22, 1
      %p255 = scmp.ne.s32.totalorder %s250, %s252
      %p256 = scmp.eq.s32.totalorder %s22, 0
      %p257 = por %p255, %p256
      %p258 = scmp.ne.s32.totalorder %s250, %s252
      %p259 = scmp.eq.s32.totalorder %s27, 1
      %p260 = por %p258, %p259
      %p261 = scmp.ne.s32.totalorder %s252, %s253
      %p262 = scmp.eq.s32.totalorder %s27, 0
      %p263 = por %p261, %p262
      %p264 = scmp.ne.s32.totalorder %s252, %s253
      %p265 = scmp.eq.s32.totalorder %s28, 1
      %p266 = por %p264, %p265
      %p268 = scmp.ne.s32.totalorder %s253, %s267
      %p269 = scmp.eq.s32.totalorder %s28, 0
      %p270 = por %p268, %p269
      %s271 = ssub.s32 %s22, %s29
      %p272 = scmp.eq.s32.totalorder %s271, 0
      %s274 = sadd.s32 %s273, 1
      %s275 = scalar_select %p272, %s273, %s274
      %p278 = pneg %p272
      %p279 = scmp.eq.s32.totalorder %s22, 1
      %p280 = por %p278, %p279
      %p281 = scmp.ne.s32.totalorder %s273, %s276
      %p282 = scmp.eq.s32.totalorder %s22, 0
      %p283 = por %p281, %p282
      %p284 = scmp.ne.s32.totalorder %s273, %s276
      %p285 = scmp.eq.s32.totalorder %s27, 1
      %p286 = por %p284, %p285
      %p287 = scmp.ne.s32.totalorder %s276, %s277
      %p288 = scmp.eq.s32.totalorder %s27, 0
      %p289 = por %p287, %p288
      %p290 = scmp.ne.s32.totalorder %s276, %s277
      %p291 = scmp.eq.s32.totalorder %s28, 1
      %p292 = por %p290, %p291
      %p294 = scmp.ne.s32.totalorder %s277, %s293
      %p295 = scmp.eq.s32.totalorder %s28, 0
      %p296 = por %p294, %p295
      %p297 = scmp.le.s32.totalorder 1, %s22
      %p298 = scmp.lt.s32.totalorder %s22, 3
      %p299 = pnand %p297, %p298
      %p300 = pneg %p299
      // Predicated region
      $region9: #{tpu_custom_call.1} parent=5 // pred_check
        _
      $region10: #{tpu_custom_call.1} parent=5 // pred_check_branch
        %302 = sbr.rel (%p299) target = $region12
      $region11: #{tpu_custom_call.1} parent=5 // pred_region
        %s303 = ssub.s32 %s22, 1
        // Predicated region
        $region13: #{tpu_custom_call.1} parent=11 // pred_check
          %p304 = pneg %p95
        $region14: #{tpu_custom_call.1} parent=11 // pred_check_branch
          %306 = sbr.rel (%p304) target = $region16
        $region15: #{tpu_custom_call.1} parent=11 // pred_region
          _
        $region16: #{tpu_custom_call.1} parent=11 // pred_fallthru
          _
        // Predicated region
        $region17: #{tpu_custom_call.1} parent=11 // pred_check
          %p307 = pneg %p116
        $region18: #{tpu_custom_call.1} parent=11 // pred_check_branch
          %309 = sbr.rel (%p307) target = $region20
        $region19: #{tpu_custom_call.1} parent=11 // pred_region
          %s311 = ssub.s32 16, 16
          %312 = vsyncadd [#allocation3], %s311
          %s314 = sshll.u32 [#allocation2], 4
          %s315 = int_to_ptr.vmem [resolvable:$true] %s314
          %317 = dma.hbm_to_vmem [thread:$0]  %s3, 16, %s315, [#allocation3]
        $region20: #{tpu_custom_call.1} parent=11 // pred_fallthru
          _
        // Predicated region
        $region21: #{tpu_custom_call.1} parent=11 // pred_check
          %p318 = pneg %p137
        $region22: #{tpu_custom_call.1} parent=11 // pred_check_branch
          %320 = sbr.rel (%p318) target = $region24
        $region23: #{tpu_custom_call.1} parent=11 // pred_region
          _
        $region24: #{tpu_custom_call.1} parent=11 // pred_fallthru
          _
        // Predicated region
        $region25: #{tpu_custom_call.1} parent=11 // pred_check
          %p321 = pneg %p158
        $region26: #{tpu_custom_call.1} parent=11 // pred_check_branch
          %323 = sbr.rel (%p321) target = $region28
        $region27: #{tpu_custom_call.1} parent=11 // pred_region
          _
        $region28: #{tpu_custom_call.1} parent=11 // pred_fallthru
          _
        // Predicated region
        $region29: #{tpu_custom_call.1} parent=11 // pred_check
          %p324 = pneg %p179
        $region30: #{tpu_custom_call.1} parent=11 // pred_check_branch
          %326 = sbr.rel (%p324) target = $region32
        $region31: #{tpu_custom_call.1} parent=11 // pred_region
          %s328 = ssub.s32 16, 16
          %329 = vsyncadd [#allocation6], %s328
          %s331 = sshll.u32 [#allocation5], 4
          %s332 = int_to_ptr.vmem [resolvable:$true] %s331
          %334 = dma.hbm_to_vmem [thread:$0]  %s6, 16, %s332, [#allocation6]
        $region32: #{tpu_custom_call.1} parent=11 // pred_fallthru
          _
        // Predicated region
        $region33: #{tpu_custom_call.1} parent=11 // pred_check
          %p335 = pneg %p200
        $region34: #{tpu_custom_call.1} parent=11 // pred_check_branch
          %337 = sbr.rel (%p335) target = $region36
        $region35: #{tpu_custom_call.1} parent=11 // pred_region
          _
        $region36: #{tpu_custom_call.1} parent=11 // pred_fallthru
          _
        // Predicated region
        $region37: #{tpu_custom_call.1} parent=11 // pred_check
          %p338 = pneg %p221
        $region38: #{tpu_custom_call.1} parent=11 // pred_check_branch
          %340 = sbr.rel (%p338) target = $region40
        $region39: #{tpu_custom_call.1} parent=11 // pred_region
          _
        $region40: #{tpu_custom_call.1} parent=11 // pred_fallthru
          _
        // Predicated region
        $region41: #{tpu_custom_call.1} parent=11 // pred_check
          %p341 = pneg %p242
        $region42: #{tpu_custom_call.1} parent=11 // pred_check_branch
          %343 = sbr.rel (%p341) target = $region44
        $region43: #{tpu_custom_call.1} parent=11 // pred_region
          _
        $region44: #{tpu_custom_call.1} parent=11 // pred_fallthru
          _
        // Predicated region
        $region45: #{tpu_custom_call.1} parent=11 // pred_check
          %p344 = pneg %p263
        $region46: #{tpu_custom_call.1} parent=11 // pred_check_branch
          %346 = sbr.rel (%p344) target = $region48
        $region47: #{tpu_custom_call.1} parent=11 // pred_region
          _
        $region48: #{tpu_custom_call.1} parent=11 // pred_fallthru
          _
      $region12: #{tpu_custom_call.1} parent=5 // pred_fallthru
        _
      %p347 = scmp.lt.s32.totalorder %s22, 2
      // Predicated region
      $region49: #{tpu_custom_call.1} parent=5 // pred_check
        %p348 = pneg %p347
      $region50: #{tpu_custom_call.1} parent=5 // pred_check_branch
        %350 = sbr.rel (%p348) target = $region52
      $region51: #{tpu_custom_call.1} parent=5 // pred_region
        // Predicated region
        $region53: #{tpu_custom_call.1} parent=51 // pred_check
          %p351 = pneg %p42
        $region54: #{tpu_custom_call.1} parent=51 // pred_check_branch
          %353 = sbr.rel (%p351) target = $region56
        $region55: #{tpu_custom_call.1} parent=51 // pred_region
          %p354 = scmp.lt.s32.totalorder %s22, 1
          %s355 = scalar_select %p354, %s22, 1
          %s356 = smul.addr %s355, 8
          %s357 = scalar_lea.vmem %s0, %s356
        $region56: #{tpu_custom_call.1} parent=51 // pred_fallthru
          _
        // Predicated region
        $region57: #{tpu_custom_call.1} parent=51 // pred_check
          %p358 = pneg %p68
        $region58: #{tpu_custom_call.1} parent=51 // pred_check_branch
          %360 = sbr.rel (%p358) target = $region60
        $region59: #{tpu_custom_call.1} parent=51 // pred_region
          %p361 = scmp.lt.s32.totalorder %s22, 1
          %s362 = scalar_select %p361, %s22, 1
          %s363 = smul.addr %s362, 8
          %s364 = scalar_lea.vmem %s1, %s363
        $region60: #{tpu_custom_call.1} parent=51 // pred_fallthru
          _
      $region52: #{tpu_custom_call.1} parent=5 // pred_fallthru
        _
      %p365 = scmp.le.s32.totalorder 1, %s22
      %p366 = scmp.lt.s32.totalorder %s22, 3
      %p367 = pnand %p365, %p366
      %p368 = pneg %p367
      // Predicated region
      $region61: #{tpu_custom_call.1} parent=5 // pred_check
        _
      $region62: #{tpu_custom_call.1} parent=5 // pred_check_branch
        %370 = sbr.rel (%p367) target = $region64
      $region63: #{tpu_custom_call.1} parent=5 // pred_region
        %s371 = ssub.s32 %s22, 1
        // Predicated region
        $region65: #{tpu_custom_call.1} parent=63 // pred_check
          %p372 = pneg %p116
        $region66: #{tpu_custom_call.1} parent=63 // pred_check_branch
          %374 = sbr.rel (%p372) target = $region68
        $region67: #{tpu_custom_call.1} parent=63 // pred_region
          %375 = dma.done [#allocation3], 16
        $region68: #{tpu_custom_call.1} parent=63 // pred_fallthru
          _
        // Predicated region
        $region69: #{tpu_custom_call.1} parent=63 // pred_check
          %p376 = pneg %p179
        $region70: #{tpu_custom_call.1} parent=63 // pred_check_branch
          %378 = sbr.rel (%p376) target = $region72
        $region71: #{tpu_custom_call.1} parent=63 // pred_region
          %379 = dma.done [#allocation6], 16
        $region72: #{tpu_custom_call.1} parent=63 // pred_fallthru
          _
        %p380 = scmp.lt.s32.totalorder %s27, 1
        %s381 = scalar_select %p380, %s27, 1
        %s382 = smul.addr %s381, 8
        %s383 = scalar_lea.vmem %s0, %s382
        %p384 = pneg %p48
        %p385 = pneg %p45
        %p386 = scmp.lt.s32.totalorder %s27, 1
        %s387 = scalar_select %p386, %s27, 1
        %s388 = smul.addr %s387, 8
        %s389 = scalar_lea.vmem %s1, %s388
        %p390 = pneg %p74
        %p391 = pneg %p71
        %p392 = pneg %p95
        %p393 = pneg %p92
        %p394 = pneg %p116
        %p395 = pneg %p113
        %p396 = pneg %p137
        %p397 = pneg %p134
        %p398 = pneg %p158
        %p399 = pneg %p155
        %p400 = pneg %p179
        %p401 = pneg %p176
        %p402 = pneg %p200
        %p403 = pneg %p197
        %p404 = pneg %p221
        %p405 = pneg %p218
        %p406 = pneg %p242
        %p407 = pneg %p239
        %p408 = pneg %p263
        %p409 = pneg %p260
        %p410 = pneg %p289
        %p411 = pneg %p286
        %s412 = sand.u32 %s276, 1
        %s413 = scalar_lea.sflag [#allocation4], %s412
        %s414 = sand.u32 %s276, 1
        %s415 = smul.addr %s414, 8
        %s416 = scalar_lea.vmem [#allocation7], %s415
        %p417 = scmp.lt.s32.totalorder %s27, 1
        %s418 = scalar_select %p417, %s27, 1
        %s419 = smul.addr %s418, 8
        %s420 = scalar_lea.vmem %s0, %s419
        %p421 = scmp.lt.s32.totalorder %s27, 1
        %s422 = scalar_select %p421, %s27, 1
        %s423 = smul.addr %s422, 8
        %s424 = scalar_lea.vmem %s1, %s423
        %v425 = vld [vmem:[%s420] sm:$0xff]
        %v426 = vld [vmem:[%s424] sm:$0xff]
        %v427 = vld [vmem:[%s2] sm:$0xff]
        %v428 = vld [vmem:[#allocation2] sm:$0x1]
        %v429 = vld [vmem:[%s4] sm:$0xff]
        %vm430 = vcmask 64512
        %v432 = vsel %vm430, %v425, 0
        %434 = vmatprep.subr.mxu0 0.0
        %435 = vmatpush1.msra.mxu0 0.0
        %436 = vmatprep.subr.mxu0 0.0
        %437 = vmatpush1.msra.mxu0 0.0
        %438 = vmatprep.subr.mxu0 0.0
        %439 = vmatpush1.msra.mxu0 0.0
        %440 = vmatprep.subr.mxu0 0.0
        %441 = vmatpush1.msra.mxu0 0.0
        %442 = vmatprep.subr.mxu0 0.0
        %443 = vmatpush1.msra.mxu0 0.0
        %444 = vmatprep.subr.mxu0 0.0
        %445 = vmatpush1.msra.mxu0 0.0
        %446 = vmatprep.subr.mxu0 0.0
        %447 = vmatpush1.msra.mxu0 0.0
        %448 = vmatprep.subr.mxu0 0.0
        %449 = vmatpush1.msra.mxu0 0.0
        %450 = vmatprep.subr.mxu0 0.0
        %451 = vmatpush1.msra.mxu0 0.0
        %452 = vmatprep.subr.mxu0 0.0
        %453 = vmatpush1.msra.mxu0 0.0
        %454 = vmatprep.subr.mxu0 0.0
        %455 = vmatpush1.msra.mxu0 0.0
        %456 = vmatprep.subr.mxu0 0.0
        %457 = vmatpush1.msra.mxu0 0.0
        %458 = vmatprep.subr.mxu0 0.0
        %459 = vmatpush1.msra.mxu0 0.0
        %460 = vmatprep.subr.mxu0 0.0
        %461 = vmatpush1.msra.mxu0 0.0
        %462 = vmatprep.subr.mxu0 0.0
        %463 = vmatpush1.msra.mxu0 0.0
        %464 = vmatprep.subr.mxu0 0.0
        %465 = vmatpush1.msra.mxu0 %v427
        %466 = vmatprep.subr.mxu0 0.0
        %467 = vmatpush2.msra.mxu0 0.0
        %468 = vmatprep.subr.mxu0 0.0
        %469 = vmatpush2.msra.mxu0 0.0
        %470 = vmatprep.subr.mxu0 0.0
        %471 = vmatpush2.msra.mxu0 0.0
        %472 = vmatprep.subr.mxu0 0.0
        %473 = vmatpush2.msra.mxu0 0.0
        %474 = vmatprep.subr.mxu0 0.0
        %475 = vmatpush2.msra.mxu0 0.0
        %476 = vmatprep.subr.mxu0 0.0
        %477 = vmatpush2.msra.mxu0 0.0
        %478 = vmatprep.subr.mxu0 0.0
        %479 = vmatpush2.msra.mxu0 0.0
        %480 = vmatprep.subr.mxu0 0.0
        %481 = vmatpush2.msra.mxu0 0.0
        %482 = vmatprep.subr.mxu0 0.0
        %483 = vmatpush2.msra.mxu0 0.0
        %484 = vmatprep.subr.mxu0 0.0
        %485 = vmatpush2.msra.mxu0 0.0
        %486 = vmatprep.subr.mxu0 0.0
        %487 = vmatpush2.msra.mxu0 0.0
        %488 = vmatprep.subr.mxu0 0.0
        %489 = vmatpush2.msra.mxu0 0.0
        %490 = vmatprep.subr.mxu0 0.0
        %491 = vmatpush2.msra.mxu0 0.0
        %492 = vmatprep.subr.mxu0 0.0
        %493 = vmatpush2.msra.mxu0 0.0
        %494 = vmatprep.subr.mxu0 0.0
        %495 = vmatpush2.msra.mxu0 0.0
        %496 = vmatprep.subr.mxu0 0.0
        %497 = vmatpush2.msra.mxu0 0.0
        %498 = vmatprep.mubr.f32.mxu0 0.0
        %499 = vmatmul.mubr.f32.gmra.mxu0 %v432
        %v500 = vpop.f32.mrf.mxu0
        %v501 = vadd.f32 0.0, %v500
        %v502 = vpop.f32.mrf.mxu0
        %503 = vdwg.mxu0
        %505 = vset.pattern.permute.xlu0 0
        %506 = vperm.xlu0 %505, %v426
        %v507 = vpop.permute.xlu0 %506
        %v509 = vmul.f32 %v425, %v507
        %v510 = vsel %vm430, %v509, 0.0
        %v511 = vrot.slane %v510, 4
        %v512 = vadd.f32 %v510, %v511
        %v513 = vrot.slane %v512, 2
        %v514 = vadd.f32 %v512, %v513
        %v515 = vrot.slane %v514, 1
        %v516 = vadd.f32 %v514, %v515
        %v518 = vsel %vm430, %v516, 0
        %520 = vmatprep.subr.mxu0 0.0
        %521 = vmatpush1.msra.mxu0 0.0
        %522 = vmatprep.subr.mxu0 0.0
        %523 = vmatpush1.msra.mxu0 0.0
        %524 = vmatprep.subr.mxu0 0.0
        %525 = vmatpush1.msra.mxu0 0.0
        %526 = vmatprep.subr.mxu0 0.0
        %527 = vmatpush1.msra.mxu0 0.0
        %528 = vmatprep.subr.mxu0 0.0
        %529 = vmatpush1.msra.mxu0 0.0
        %530 = vmatprep.subr.mxu0 0.0
        %531 = vmatpush1.msra.mxu0 0.0
        %532 = vmatprep.subr.mxu0 0.0
        %533 = vmatpush1.msra.mxu0 0.0
        %534 = vmatprep.subr.mxu0 0.0
        %535 = vmatpush1.msra.mxu0 0.0
        %536 = vmatprep.subr.mxu0 0.0
        %537 = vmatpush1.msra.mxu0 0.0
        %538 = vmatprep.subr.mxu0 0.0
        %539 = vmatpush1.msra.mxu0 0.0
        %540 = vmatprep.subr.mxu0 0.0
        %541 = vmatpush1.msra.mxu0 0.0
        %542 = vmatprep.subr.mxu0 0.0
        %543 = vmatpush1.msra.mxu0 0.0
        %544 = vmatprep.subr.mxu0 0.0
        %545 = vmatpush1.msra.mxu0 0.0
        %546 = vmatprep.subr.mxu0 0.0
        %547 = vmatpush1.msra.mxu0 0.0
        %548 = vmatprep.subr.mxu0 0.0
        %549 = vmatpush1.msra.mxu0 0.0
        %550 = vmatprep.subr.mxu0 0.0
        %551 = vmatpush1.msra.mxu0 %v429
        %552 = vmatprep.subr.mxu0 0.0
        %553 = vmatpush2.msra.mxu0 0.0
        %554 = vmatprep.subr.mxu0 0.0
        %555 = vmatpush2.msra.mxu0 0.0
        %556 = vmatprep.subr.mxu0 0.0
        %557 = vmatpush2.msra.mxu0 0.0
        %558 = vmatprep.subr.mxu0 0.0
        %559 = vmatpush2.msra.mxu0 0.0
        %560 = vmatprep.subr.mxu0 0.0
        %561 = vmatpush2.msra.mxu0 0.0
        %562 = vmatprep.subr.mxu0 0.0
        %563 = vmatpush2.msra.mxu0 0.0
        %564 = vmatprep.subr.mxu0 0.0
        %565 = vmatpush2.msra.mxu0 0.0
        %566 = vmatprep.subr.mxu0 0.0
        %567 = vmatpush2.msra.mxu0 0.0
        %568 = vmatprep.subr.mxu0 0.0
        %569 = vmatpush2.msra.mxu0 0.0
        %570 = vmatprep.subr.mxu0 0.0
        %571 = vmatpush2.msra.mxu0 0.0
        %572 = vmatprep.subr.mxu0 0.0
        %573 = vmatpush2.msra.mxu0 0.0
        %574 = vmatprep.subr.mxu0 0.0
        %575 = vmatpush2.msra.mxu0 0.0
        %576 = vmatprep.subr.mxu0 0.0
        %577 = vmatpush2.msra.mxu0 0.0
        %578 = vmatprep.subr.mxu0 0.0
        %579 = vmatpush2.msra.mxu0 0.0
        %580 = vmatprep.subr.mxu0 0.0
        %581 = vmatpush2.msra.mxu0 0.0
        %582 = vmatprep.subr.mxu0 0.0
        %583 = vmatpush2.msra.mxu0 0.0
        %584 = vmatprep.mubr.f32.mxu0 0.0
        %585 = vmatmul.mubr.f32.gmra.mxu0 %v518
        %v586 = vpop.f32.mrf.mxu0
        %v587 = vadd.f32 %v428, %v586
        %v588 = vpop.f32.mrf.mxu0
        %589 = vdwg.mxu0
        %v590 = vlaneseq
        %v591 = vshrl.u32 %v590, 7
        %v592 = vsub.s32 0, %v591
        %v593 = vrot.slane %v587, %v592
        %v594 = vadd.f32 %v501, %v593
        %v595 = vmax.f32 %v594, 0.0
        %v596 = vld [vmem:[%s5] sm:$0xff]
        %v597 = vld [vmem:[%s5 + $0x8] sm:$0xff]
        %v598 = vld [vmem:[%s5 + $0x10] sm:$0xff]
        %v599 = vld [vmem:[%s5 + $0x18] sm:$0xff]
        %v600 = vld [vmem:[#allocation5] sm:$0x1]
        %v601 = vld [vmem:[%s7] sm:$0xff]
        %v602 = vld [vmem:[%s7 + $0x8] sm:$0xff]
        %v603 = vld [vmem:[%s7 + $0x10] sm:$0xff]
        %v604 = vld [vmem:[%s7 + $0x18] sm:$0xff]
        %vm605 = vcmask 261120
        %v607 = vsel %vm605, %v595, 0
        %609 = vmatprep.subr.mxu0 0.0
        %610 = vmatpush1.msra.mxu0 0.0
        %611 = vmatprep.subr.mxu0 0.0
        %612 = vmatpush1.msra.mxu0 0.0
        %613 = vmatprep.subr.mxu0 0.0
        %614 = vmatpush1.msra.mxu0 0.0
        %615 = vmatprep.subr.mxu0 0.0
        %616 = vmatpush1.msra.mxu0 0.0
        %617 = vmatprep.subr.mxu0 0.0
        %618 = vmatpush1.msra.mxu0 0.0
        %619 = vmatprep.subr.mxu0 0.0
        %620 = vmatpush1.msra.mxu0 0.0
        %621 = vmatprep.subr.mxu0 0.0
        %622 = vmatpush1.msra.mxu0 0.0
        %623 = vmatprep.subr.mxu0 0.0
        %624 = vmatpush1.msra.mxu0 0.0
        %625 = vmatprep.subr.mxu0 0.0
        %626 = vmatpush1.msra.mxu0 0.0
        %627 = vmatprep.subr.mxu0 0.0
        %628 = vmatpush1.msra.mxu0 0.0
        %629 = vmatprep.subr.mxu0 0.0
        %630 = vmatpush1.msra.mxu0 0.0
        %631 = vmatprep.subr.mxu0 0.0
        %632 = vmatpush1.msra.mxu0 0.0
        %633 = vmatprep.subr.mxu0 0.0
        %634 = vmatpush1.msra.mxu0 %v599
        %635 = vmatprep.subr.mxu0 0.0
        %636 = vmatpush1.msra.mxu0 %v598
        %637 = vmatprep.subr.mxu0 0.0
        %638 = vmatpush1.msra.mxu0 %v597
        %639 = vmatprep.subr.mxu0 0.0
        %640 = vmatpush1.msra.mxu0 %v596
        %641 = vmatprep.subr.mxu0 0.0
        %642 = vmatpush2.msra.mxu0 0.0
        %643 = vmatprep.subr.mxu0 0.0
        %644 = vmatpush2.msra.mxu0 0.0
        %645 = vmatprep.subr.mxu0 0.0
        %646 = vmatpush2.msra.mxu0 0.0
        %647 = vmatprep.subr.mxu0 0.0
        %648 = vmatpush2.msra.mxu0 0.0
        %649 = vmatprep.subr.mxu0 0.0
        %650 = vmatpush2.msra.mxu0 0.0
        %651 = vmatprep.subr.mxu0 0.0
        %652 = vmatpush2.msra.mxu0 0.0
        %653 = vmatprep.subr.mxu0 0.0
        %654 = vmatpush2.msra.mxu0 0.0
        %655 = vmatprep.subr.mxu0 0.0
        %656 = vmatpush2.msra.mxu0 0.0
        %657 = vmatprep.subr.mxu0 0.0
        %658 = vmatpush2.msra.mxu0 0.0
        %659 = vmatprep.subr.mxu0 0.0
        %660 = vmatpush2.msra.mxu0 0.0
        %661 = vmatprep.subr.mxu0 0.0
        %662 = vmatpush2.msra.mxu0 0.0
        %663 = vmatprep.subr.mxu0 0.0
        %664 = vmatpush2.msra.mxu0 0.0
        %665 = vmatprep.subr.mxu0 0.0
        %666 = vmatpush2.msra.mxu0 0.0
        %667 = vmatprep.subr.mxu0 0.0
        %668 = vmatpush2.msra.mxu0 0.0
        %669 = vmatprep.subr.mxu0 0.0
        %670 = vmatpush2.msra.mxu0 0.0
        %671 = vmatprep.subr.mxu0 0.0
        %672 = vmatpush2.msra.mxu0 0.0
        %673 = vmatprep.mubr.f32.mxu0 0.0
        %674 = vmatmul.mubr.f32.gmra.mxu0 %v607
        %v675 = vpop.f32.mrf.mxu0
        %v676 = vadd.f32 0.0, %v675
        %v677 = vpop.f32.mrf.mxu0
        %678 = vdwg.mxu0
        %v679 = vmul.f32 %v595, %v507
        %v680 = vsel %vm605, %v679, 0.0
        %v681 = vrot.slane %v680, 4
        %v682 = vadd.f32 %v680, %v681
        %v683 = vrot.slane %v682, 2
        %v684 = vadd.f32 %v682, %v683
        %v685 = vrot.slane %v684, 1
        %v686 = vadd.f32 %v684, %v685
        %v688 = vsel %vm605, %v686, 0
        %690 = vmatprep.subr.mxu0 0.0
        %691 = vmatpush1.msra.mxu0 0.0
        %692 = vmatprep.subr.mxu0 0.0
        %693 = vmatpush1.msra.mxu0 0.0
        %694 = vmatprep.subr.mxu0 0.0
        %695 = vmatpush1.msra.mxu0 0.0
        %696 = vmatprep.subr.mxu0 0.0
        %697 = vmatpush1.msra.mxu0 0.0
        %698 = vmatprep.subr.mxu0 0.0
        %699 = vmatpush1.msra.mxu0 0.0
        %700 = vmatprep.subr.mxu0 0.0
        %701 = vmatpush1.msra.mxu0 0.0
        %702 = vmatprep.subr.mxu0 0.0
        %703 = vmatpush1.msra.mxu0 0.0
        %704 = vmatprep.subr.mxu0 0.0
        %705 = vmatpush1.msra.mxu0 0.0
        %706 = vmatprep.subr.mxu0 0.0
        %707 = vmatpush1.msra.mxu0 0.0
        %708 = vmatprep.subr.mxu0 0.0
        %709 = vmatpush1.msra.mxu0 0.0
        %710 = vmatprep.subr.mxu0 0.0
        %711 = vmatpush1.msra.mxu0 0.0
        %712 = vmatprep.subr.mxu0 0.0
        %713 = vmatpush1.msra.mxu0 0.0
        %714 = vmatprep.subr.mxu0 0.0
        %715 = vmatpush1.msra.mxu0 %v604
        %716 = vmatprep.subr.mxu0 0.0
        %717 = vmatpush1.msra.mxu0 %v603
        %718 = vmatprep.subr.mxu0 0.0
        %719 = vmatpush1.msra.mxu0 %v602
        %720 = vmatprep.subr.mxu0 0.0
        %721 = vmatpush1.msra.mxu0 %v601
        %722 = vmatprep.subr.mxu0 0.0
        %723 = vmatpush2.msra.mxu0 0.0
        %724 = vmatprep.subr.mxu0 0.0
        %725 = vmatpush2.msra.mxu0 0.0
        %726 = vmatprep.subr.mxu0 0.0
        %727 = vmatpush2.msra.mxu0 0.0
        %728 = vmatprep.subr.mxu0 0.0
        %729 = vmatpush2.msra.mxu0 0.0
        %730 = vmatprep.subr.mxu0 0.0
        %731 = vmatpush2.msra.mxu0 0.0
        %732 = vmatprep.subr.mxu0 0.0
        %733 = vmatpush2.msra.mxu0 0.0
        %734 = vmatprep.subr.mxu0 0.0
        %735 = vmatpush2.msra.mxu0 0.0
        %736 = vmatprep.subr.mxu0 0.0
        %737 = vmatpush2.msra.mxu0 0.0
        %738 = vmatprep.subr.mxu0 0.0
        %739 = vmatpush2.msra.mxu0 0.0
        %740 = vmatprep.subr.mxu0 0.0
        %741 = vmatpush2.msra.mxu0 0.0
        %742 = vmatprep.subr.mxu0 0.0
        %743 = vmatpush2.msra.mxu0 0.0
        %744 = vmatprep.subr.mxu0 0.0
        %745 = vmatpush2.msra.mxu0 0.0
        %746 = vmatprep.subr.mxu0 0.0
        %747 = vmatpush2.msra.mxu0 0.0
        %748 = vmatprep.subr.mxu0 0.0
        %749 = vmatpush2.msra.mxu0 0.0
        %750 = vmatprep.subr.mxu0 0.0
        %751 = vmatpush2.msra.mxu0 0.0
        %752 = vmatprep.subr.mxu0 0.0
        %753 = vmatpush2.msra.mxu0 0.0
        %754 = vmatprep.mubr.f32.mxu0 0.0
        %755 = vmatmul.mubr.f32.gmra.mxu0 %v688
        %v756 = vpop.f32.mrf.mxu0
        %v757 = vadd.f32 %v600, %v756
        %v758 = vpop.f32.mrf.mxu0
        %759 = vdwg.mxu0
        %v760 = vlaneseq
        %v761 = vshrl.u32 %v760, 7
        %v762 = vsub.s32 0, %v761
        %v763 = vrot.slane %v757, %v762
        %v764 = vadd.f32 %v676, %v763
        %v765 = vmax.f32 %v764, 0.0
        %v766 = vld [vmem:[%s8] sm:$0xff]
        %v767 = vld [vmem:[%s8 + $0x8] sm:$0xff]
        %v768 = vld [vmem:[%s8 + $0x10] sm:$0xff]
        %v769 = vld [vmem:[%s8 + $0x18] sm:$0xff]
        %v770 = vld [vmem:[%s9] sm:$0x1]
        %v771 = vld [vmem:[%s10] sm:$0xff]
        %v772 = vld [vmem:[%s10 + $0x8] sm:$0xff]
        %v773 = vld [vmem:[%s10 + $0x10] sm:$0xff]
        %v774 = vld [vmem:[%s10 + $0x18] sm:$0xff]
        %v776 = vsel %vm605, %v765, 0
        %778 = vmatprep.subr.mxu0 0.0
        %779 = vmatpush1.msra.mxu0 0.0
        %780 = vmatprep.subr.mxu0 0.0
        %781 = vmatpush1.msra.mxu0 0.0
        %782 = vmatprep.subr.mxu0 0.0
        %783 = vmatpush1.msra.mxu0 0.0
        %784 = vmatprep.subr.mxu0 0.0
        %785 = vmatpush1.msra.mxu0 0.0
        %786 = vmatprep.subr.mxu0 0.0
        %787 = vmatpush1.msra.mxu0 0.0
        %788 = vmatprep.subr.mxu0 0.0
        %789 = vmatpush1.msra.mxu0 0.0
        %790 = vmatprep.subr.mxu0 0.0
        %791 = vmatpush1.msra.mxu0 0.0
        %792 = vmatprep.subr.mxu0 0.0
        %793 = vmatpush1.msra.mxu0 0.0
        %794 = vmatprep.subr.mxu0 0.0
        %795 = vmatpush1.msra.mxu0 0.0
        %796 = vmatprep.subr.mxu0 0.0
        %797 = vmatpush1.msra.mxu0 0.0
        %798 = vmatprep.subr.mxu0 0.0
        %799 = vmatpush1.msra.mxu0 0.0
        %800 = vmatprep.subr.mxu0 0.0
        %801 = vmatpush1.msra.mxu0 0.0
        %802 = vmatprep.subr.mxu0 0.0
        %803 = vmatpush1.msra.mxu0 %v769
        %804 = vmatprep.subr.mxu0 0.0
        %805 = vmatpush1.msra.mxu0 %v768
        %806 = vmatprep.subr.mxu0 0.0
        %807 = vmatpush1.msra.mxu0 %v767
        %808 = vmatprep.subr.mxu0 0.0
        %809 = vmatpush1.msra.mxu0 %v766
        %810 = vmatprep.subr.mxu0 0.0
        %811 = vmatpush2.msra.mxu0 0.0
        %812 = vmatprep.subr.mxu0 0.0
        %813 = vmatpush2.msra.mxu0 0.0
        %814 = vmatprep.subr.mxu0 0.0
        %815 = vmatpush2.msra.mxu0 0.0
        %816 = vmatprep.subr.mxu0 0.0
        %817 = vmatpush2.msra.mxu0 0.0
        %818 = vmatprep.subr.mxu0 0.0
        %819 = vmatpush2.msra.mxu0 0.0
        %820 = vmatprep.subr.mxu0 0.0
        %821 = vmatpush2.msra.mxu0 0.0
        %822 = vmatprep.subr.mxu0 0.0
        %823 = vmatpush2.msra.mxu0 0.0
        %824 = vmatprep.subr.mxu0 0.0
        %825 = vmatpush2.msra.mxu0 0.0
        %826 = vmatprep.subr.mxu0 0.0
        %827 = vmatpush2.msra.mxu0 0.0
        %828 = vmatprep.subr.mxu0 0.0
        %829 = vmatpush2.msra.mxu0 0.0
        %830 = vmatprep.subr.mxu0 0.0
        %831 = vmatpush2.msra.mxu0 0.0
        %832 = vmatprep.subr.mxu0 0.0
        %833 = vmatpush2.msra.mxu0 0.0
        %834 = vmatprep.subr.mxu0 0.0
        %835 = vmatpush2.msra.mxu0 0.0
        %836 = vmatprep.subr.mxu0 0.0
        %837 = vmatpush2.msra.mxu0 0.0
        %838 = vmatprep.subr.mxu0 0.0
        %839 = vmatpush2.msra.mxu0 0.0
        %840 = vmatprep.subr.mxu0 0.0
        %841 = vmatpush2.msra.mxu0 0.0
        %842 = vmatprep.mubr.f32.mxu0 0.0
        %843 = vmatmul.mubr.f32.gmra.mxu0 %v776
        %v844 = vpop.f32.mrf.mxu0
        %v845 = vadd.f32 0.0, %v844
        %v846 = vpop.f32.mrf.mxu0
        %847 = vdwg.mxu0
        %v848 = vmul.f32 %v765, %v507
        %v849 = vsel %vm605, %v848, 0.0
        %v850 = vrot.slane %v849, 4
        %v851 = vadd.f32 %v849, %v850
        %v852 = vrot.slane %v851, 2
        %v853 = vadd.f32 %v851, %v852
        %v854 = vrot.slane %v853, 1
        %v855 = vadd.f32 %v853, %v854
        %v857 = vsel %vm605, %v855, 0
        %859 = vmatprep.subr.mxu0 0.0
        %860 = vmatpush1.msra.mxu0 0.0
        %861 = vmatprep.subr.mxu0 0.0
        %862 = vmatpush1.msra.mxu0 0.0
        %863 = vmatprep.subr.mxu0 0.0
        %864 = vmatpush1.msra.mxu0 0.0
        %865 = vmatprep.subr.mxu0 0.0
        %866 = vmatpush1.msra.mxu0 0.0
        %867 = vmatprep.subr.mxu0 0.0
        %868 = vmatpush1.msra.mxu0 0.0
        %869 = vmatprep.subr.mxu0 0.0
        %870 = vmatpush1.msra.mxu0 0.0
        %871 = vmatprep.subr.mxu0 0.0
        %872 = vmatpush1.msra.mxu0 0.0
        %873 = vmatprep.subr.mxu0 0.0
        %874 = vmatpush1.msra.mxu0 0.0
        %875 = vmatprep.subr.mxu0 0.0
        %876 = vmatpush1.msra.mxu0 0.0
        %877 = vmatprep.subr.mxu0 0.0
        %878 = vmatpush1.msra.mxu0 0.0
        %879 = vmatprep.subr.mxu0 0.0
        %880 = vmatpush1.msra.mxu0 0.0
        %881 = vmatprep.subr.mxu0 0.0
        %882 = vmatpush1.msra.mxu0 0.0
        %883 = vmatprep.subr.mxu0 0.0
        %884 = vmatpush1.msra.mxu0 %v774
        %885 = vmatprep.subr.mxu0 0.0
        %886 = vmatpush1.msra.mxu0 %v773
        %887 = vmatprep.subr.mxu0 0.0
        %888 = vmatpush1.msra.mxu0 %v772
        %889 = vmatprep.subr.mxu0 0.0
        %890 = vmatpush1.msra.mxu0 %v771
        %891 = vmatprep.subr.mxu0 0.0
        %892 = vmatpush2.msra.mxu0 0.0
        %893 = vmatprep.subr.mxu0 0.0
        %894 = vmatpush2.msra.mxu0 0.0
        %895 = vmatprep.subr.mxu0 0.0
        %896 = vmatpush2.msra.mxu0 0.0
        %897 = vmatprep.subr.mxu0 0.0
        %898 = vmatpush2.msra.mxu0 0.0
        %899 = vmatprep.subr.mxu0 0.0
        %900 = vmatpush2.msra.mxu0 0.0
        %901 = vmatprep.subr.mxu0 0.0
        %902 = vmatpush2.msra.mxu0 0.0
        %903 = vmatprep.subr.mxu0 0.0
        %904 = vmatpush2.msra.mxu0 0.0
        %905 = vmatprep.subr.mxu0 0.0
        %906 = vmatpush2.msra.mxu0 0.0
        %907 = vmatprep.subr.mxu0 0.0
        %908 = vmatpush2.msra.mxu0 0.0
        %909 = vmatprep.subr.mxu0 0.0
        %910 = vmatpush2.msra.mxu0 0.0
        %911 = vmatprep.subr.mxu0 0.0
        %912 = vmatpush2.msra.mxu0 0.0
        %913 = vmatprep.subr.mxu0 0.0
        %914 = vmatpush2.msra.mxu0 0.0
        %915 = vmatprep.subr.mxu0 0.0
        %916 = vmatpush2.msra.mxu0 0.0
        %917 = vmatprep.subr.mxu0 0.0
        %918 = vmatpush2.msra.mxu0 0.0
        %919 = vmatprep.subr.mxu0 0.0
        %920 = vmatpush2.msra.mxu0 0.0
        %921 = vmatprep.subr.mxu0 0.0
        %922 = vmatpush2.msra.mxu0 0.0
        %923 = vmatprep.mubr.f32.mxu0 0.0
        %924 = vmatmul.mubr.f32.gmra.mxu0 %v857
        %v925 = vpop.f32.mrf.mxu0
        %v926 = vadd.f32 %v770, %v925
        %v927 = vpop.f32.mrf.mxu0
        %928 = vdwg.mxu0
        %v929 = vlaneseq
        %v930 = vshrl.u32 %v929, 7
        %v931 = vsub.s32 0, %v930
        %v932 = vrot.slane %v926, %v931
        %v933 = vadd.f32 %v845, %v932
        %v934 = vmax.f32 %v933, 0.0
        %vm935 = vcmask 130048
        %936 = vst.msk [vmem:[%s416] sm:$0xff] %vm935, %v934
        %s937 = sand.u32 %s276, 1
        %s938 = scalar_lea.sflag [#allocation4], %s937
        %s939 = sand.u32 %s276, 1
        %s940 = smul.addr %s939, 8
        %s941 = scalar_lea.vmem [#allocation7], %s940
        // Predicated region
        $region73: #{tpu_custom_call.1} parent=63 // pred_check
          %p942 = pneg %p286
        $region74: #{tpu_custom_call.1} parent=63 // pred_check_branch
          %944 = sbr.rel (%p942) target = $region76
        $region75: #{tpu_custom_call.1} parent=63 // pred_region
          %s946 = ssub.s32 128, 128
          %947 = vsyncadd %s938, %s946
          %s948 = smul.addr %s27, 128
          %s949 = scalar_lea.hbm %s11, %s948
          %s951 = sshll.u32 %s941, 4
          %s952 = int_to_ptr.vmem [resolvable:$true] %s951
          %954 = dma.vmem_to_hbm [thread:$0]  %s952, 128, %s949, %s938
        $region76: #{tpu_custom_call.1} parent=63 // pred_fallthru
          _
      $region64: #{tpu_custom_call.1} parent=5 // pred_fallthru
        _
      %p955 = scmp.le.s32.totalorder 2, %s22
      // Predicated region
      $region77: #{tpu_custom_call.1} parent=5 // pred_check
        %p956 = pneg %p955
      $region78: #{tpu_custom_call.1} parent=5 // pred_check_branch
        %958 = sbr.rel (%p956) target = $region80
      $region79: #{tpu_custom_call.1} parent=5 // pred_region
        %s959 = ssub.s32 %s22, 2
        // Predicated region
        $region81: #{tpu_custom_call.1} parent=79 // pred_check
          %p960 = pneg %p292
        $region82: #{tpu_custom_call.1} parent=79 // pred_check_branch
          %962 = sbr.rel (%p960) target = $region84
        $region83: #{tpu_custom_call.1} parent=79 // pred_region
          %s963 = sand.u32 %s277, 1
          %s964 = scalar_lea.sflag [#allocation4], %s963
          %s965 = sand.u32 %s277, 1
          %s966 = smul.addr %s965, 8
          %s967 = scalar_lea.vmem [#allocation7], %s966
          %968 = dma.done %s964, 128
        $region84: #{tpu_custom_call.1} parent=79 // pred_fallthru
          _
      $region80: #{tpu_custom_call.1} parent=5 // pred_fallthru
        _
    $region6: #{tpu_custom_call.1} parent=1 // loop_footer
      %s26 = sadd.s32 1, %s22
    $region7: #{tpu_custom_call.1} parent=1 // loop_footer_branch
      %21 = sbr.rel target = $region3
    $region8: #{tpu_custom_call.1} parent=1 // loop_exit
      _
    %969 = vsyncpa [#allocation3], 1
    %s970 = scalar_lea.sflag [#allocation3], 1
    %971 = vsyncpa %s970, 1
    %972 = vsyncpa [#allocation6], 1
    %973 = vsyncpa [#allocation4], 1
    %s974 = scalar_lea.sflag [#allocation4], 1
    %975 = vsyncpa %s974, 1

</llo_original>
